<compile_context>
chip_gen: v7x
topology: tpu7x:2x2x1
jax: 0.10.0
libtpu: 0.0.40
codegen_flags: <defaults>
</compile_context>

<pallas_src>
import functools
import math

import jax
import jax.numpy as jnp
import numpy as np
from jax.experimental import pallas as pl
from jax.experimental.pallas import tpu as pltpu


def _round_up(x, m):
    return (x + m - 1) // m * m


# Measured Pallas tile-size efficiency vs. HBM roofline for mem-bound kernels
# (tile 128 -> ~29%, 256 -> ~63%, 512 -> ~85%, >=768 -> ~86%).  TM is picked to
# maximize efficiency(tile) * useful_fraction(M, tile), so large feature maps
# get 512-1024-lane tiles while small ones avoid padding waste.
_TM_EFFICIENCY = ((128, 0.29), (256, 0.63), (384, 0.75), (512, 0.85),
                  (640, 0.855), (768, 0.86), (896, 0.86), (1024, 0.86))


def _pick_tm(m, kc_p):
    best_t, best_score = 128, -1.0
    for t, eff in _TM_EFFICIENCY:
        # Keep the double-buffered im2col block well inside the scoped-VMEM
        # default (headroom for v7x's 64 MiB physical VMEM).
        if t > 128 and kc_p * t * 2 * 2 > (12 << 20):
            continue
        score = eff * m / _round_up(m, t)
        if score > best_score:
            best_score, best_t = score, t
    return best_t


def _conv_bn_relu_kernel(x_ref, w_ref, b_ref, o_ref):
    # x_ref: (1, Kc_p, TM) bf16 im2col block (contraction on sublanes, spatial on lanes)
    # w_ref: (TNc, Kc_p)  bf16 folded (conv weight * BN scale)
    # b_ref: (TNc, 1)     f32  folded BN bias (broadcast along lanes)
    acc = jnp.dot(w_ref[...], x_ref[0], preferred_element_type=jnp.float32)
    o_ref[0] = jnp.maximum(acc + b_ref[...], 0.0).astype(o_ref.dtype)


def _conv_bn_relu_skip_kernel(x_ref, w_ref, b_ref, s_ref, o_ref):
    acc = jnp.dot(w_ref[...], x_ref[0], preferred_element_type=jnp.float32)
    y = jnp.maximum(acc + b_ref[...], 0.0) + s_ref[0].astype(jnp.float32)  # ReLU then residual (f32)
    o_ref[0] = y.astype(o_ref.dtype)


def conv_norm_act(x_nchw, weight_oihw, gamma, beta, running_mean, running_var,
                  *, kernel_size, stride=1, skip=False, eps=1e-6):
    """ConvNormAct forward. x_nchw: (N, Cin, H, W) float32. Returns (N, Cout, H, W) float32."""
    if stride != 1:
        raise NotImplementedError("only stride=1 is implemented")
    K = kernel_size
    if K % 2 != 1:
        raise NotImplementedError(
            "even kernel_size gives a (H+1, W+1) PyTorch output; only odd K implemented")

    N, Cin, H, W = x_nchw.shape
    Cout = weight_oihw.shape[0]
    assert weight_oihw.shape == (Cout, Cin, K, K)
    pad = math.ceil((K - stride) / 2)               # == (K-1)//2 for odd K, stride 1
    has_skip = skip and (Cin == Cout)

    M = H * W
    Kc = K * K * Cin                                # folded contraction dim
    Kc_p = _round_up(Kc, 16)                        # bf16 sublane tile
    Cout_p = _round_up(Cout, 16)                    # bf16 output sublane tile
    TNc = Cout_p if Cout_p <= 256 else 256          # 256-wide MXU N-tile for big Cout (v6e/v7x)
    Cout_p = _round_up(Cout_p, TNc)
    TM = _pick_tm(M, Kc_p)                          # spatial (lane) tile
    Mp = _round_up(M, TM)

    # ---- XLA-side glue: im2col fold (spatial-on-lanes layout), BN folding ----
    # With allow_input_fusion below, XLA may fuse this producer into the
    # pallas_call instead of materializing it in HBM.
    x_f = x_nchw.astype(jnp.float32)
    x_sp = jnp.pad(x_f, ((0, 0), (0, 0), (pad, pad), (pad, pad)))         # spatial zero pad
    patches = [x_sp[:, :, kh:kh + H, kw:kw + W]
               for kh in range(K) for kw in range(K)]                     # each (N, Cin, H, W)
    x_cat = jnp.concatenate(patches, axis=1).reshape(N, Kc, M)            # rows ordered (kh, kw, ci)
    x_cat = jnp.pad(x_cat, ((0, 0), (0, Kc_p - Kc), (0, Mp - M))).astype(jnp.bfloat16)

    # BN (eval) affine folded: scale into the weight, bias kept as per-channel add.
    scale = gamma.astype(jnp.float32) / jnp.sqrt(running_var.astype(jnp.float32) + eps)
    bias = beta.astype(jnp.float32) - running_mean.astype(jnp.float32) * scale
    w_t = jnp.transpose(weight_oihw.astype(jnp.float32), (0, 2, 3, 1)).reshape(Cout, Kc)
    w_t = w_t * scale[:, None]
    w_t = jnp.pad(w_t, ((0, Cout_p - Cout), (0, Kc_p - Kc))).astype(jnp.bfloat16)
    bias_col = jnp.pad(bias, (0, Cout_p - Cout)).reshape(Cout_p, 1)

    args = [x_cat, w_t, bias_col]
    in_specs = [
        # NOTE: if DMA latency is still exposed after the TM enlargement,
        # pipeline_mode=pl.Buffered(3) on this spec is the next knob.
        pl.BlockSpec((1, Kc_p, TM), lambda b, c, t: (b, 0, t)),   # im2col block
        pl.BlockSpec((TNc, Kc_p), lambda b, c, t: (c, 0)),        # folded weights
        pl.BlockSpec((TNc, 1), lambda b, c, t: (c, 0)),           # folded BN bias
    ]
    kernel = _conv_bn_relu_kernel
    if has_skip:
        # bf16, Cout_p-padded skip (vs. the old 128-channel-padded f32 read),
        # tiled identically to the output so each Cout tile adds its own slice.
        x_skip = jnp.pad(x_f.reshape(N, Cin, M),
                         ((0, 0), (0, Cout_p - Cin), (0, Mp - M))).astype(jnp.bfloat16)
        args.append(x_skip)
        in_specs.append(pl.BlockSpec((1, TNc, TM), lambda b, c, t: (b, c, t)))
        kernel = _conv_bn_relu_skip_kernel

    grid = (N, Cout_p // TNc, Mp // TM)
    out_specs = pl.BlockSpec((1, TNc, TM), lambda b, c, t: (b, c, t))
    out_shape = jax.ShapeDtypeStruct((N, Cout_p, Mp), jnp.bfloat16)

    # True (unpadded) cost — advisory for XLA scheduling only.
    cost = pl.CostEstimate(
        flops=2 * N * M * Kc * Cout,
        transcendentals=0,
        bytes_accessed=(N * M * Kc * 2 + Cout * Kc * 2 + Cout * 4
                        + N * M * Cout * 2
                        + (N * M * Cin * 2 if has_skip else 0)),
    )

    y = pl.pallas_call(
        kernel,
        out_shape=out_shape,
        grid=grid,
        in_specs=in_specs,
        out_specs=out_specs,
        compiler_params=pltpu.CompilerParams(
            dimension_semantics=("parallel", "parallel", "parallel"),
            allow_input_fusion=[True] + [False] * (len(args) - 1),
        ),
        cost_estimate=cost,
    )(*args)

    # Drop padding; output is already NCHW-flattened (no transpose needed).
    # Cast back to f32 to match the PyTorch module's output dtype; a bf16
    # consumer network should keep the bf16 result instead.
    return y[:, :Cout, :M].astype(jnp.float32).reshape(N, Cout, H, W)


def _reference(x_nchw, weight_oihw, gamma, beta, mean, var, *, kernel_size,
               stride=1, skip=False, eps=1e-6):
    pad = math.ceil((kernel_size - stride) / 2)
    y = jax.lax.conv_general_dilated(
        x_nchw, weight_oihw, window_strides=(stride, stride),
        padding=((pad, pad), (pad, pad)),
        dimension_numbers=("NCHW", "OIHW", "NCHW"))
    s = (gamma / jnp.sqrt(var + eps)).reshape(1, -1, 1, 1)
    b = (beta - mean * gamma / jnp.sqrt(var + eps)).reshape(1, -1, 1, 1)
    y = jnp.maximum(y * s + b, 0.0)
    if skip and x_nchw.shape[1] == weight_oihw.shape[0]:
        y = y + x_nchw
    return y


if __name__ == "__main__":
    key = jax.random.PRNGKey(0)
    k_x, k_w, k_g, k_b, k_m, k_v = jax.random.split(key, 6)

    # ConvNormAct(dim_in=4, dim_out=4, kernel_size=3, skip=True,
    #             norm_layer='bn_2d', act_layer='relu')
    N, Cin, H, W = 2, 4, 16, 16
    Cout, K = 4, 3
    skip = True

    x = jax.random.normal(k_x, (N, Cin, H, W), jnp.float32)
    w = jax.random.normal(k_w, (Cout, Cin, K, K), jnp.float32) * 0.1
    gamma = 1.0 + 0.1 * jax.random.normal(k_g, (Cout,), jnp.float32)
    beta = 0.1 * jax.random.normal(k_b, (Cout,), jnp.float32)
    running_mean = 0.1 * jax.random.normal(k_m, (Cout,), jnp.float32)
    running_var = jnp.abs(1.0 + 0.1 * jax.random.normal(k_v, (Cout,), jnp.float32))

    fn = jax.jit(functools.partial(conv_norm_act, kernel_size=K, stride=1, skip=skip))
    out = jax.block_until_ready(fn(x, w, gamma, beta, running_mean, running_var))

    ref = _reference(x, w, gamma, beta, running_mean, running_var,
                     kernel_size=K, stride=1, skip=skip)
    # bf16 MXU operands / bf16 writeback with f32 accumulation -> bf16-level tolerance.
    np.testing.assert_allclose(np.asarray(out), np.asarray(ref),
                               rtol=2e-2, atol=2e-2)
    print("KERNEL_OK")
</pallas_src>

<mosaic_0001>
module attributes {stable_mosaic.version = 11 : i64} {
  func.func @_conv_bn_relu_skip_kernel(%arg0: i32, %arg1: i32, %arg2: i32, %arg3: memref<1x48x256xbf16, #tpu.memory_space<vmem>>, %arg4: memref<16x48xbf16, #tpu.memory_space<vmem>>, %arg5: memref<16x1xf32, #tpu.memory_space<vmem>>, %arg6: memref<1x16x256xbf16, #tpu.memory_space<vmem>>, %arg7: memref<1x16x256xbf16, #tpu.memory_space<vmem>>) attributes {dimension_semantics = [#tpu.dimension_semantics<parallel>, #tpu.dimension_semantics<parallel>, #tpu.dimension_semantics<parallel>], iteration_bounds = array<i64: 2, 1, 1>, scalar_prefetch = 0 : i64, scratch_operands = 0 : i64, tpu.core_type = #tpu.core_type<tc>, window_params = [{transform_indices = @transform_0, window_bounds = array<i64: 1, 48, 256>}, {transform_indices = @transform_1, window_bounds = array<i64: 16, 48>}, {transform_indices = @transform_2, window_bounds = array<i64: 16, 1>}, {transform_indices = @transform_3, window_bounds = array<i64: 1, 16, 256>}, {transform_indices = @transform_4, window_bounds = array<i64: 1, 16, 256>}]} {
    %c0 = arith.constant 0 : index
    %c0_0 = arith.constant 0 : index
    %0 = vector.load %arg4[%c0, %c0_0] : memref<16x48xbf16, #tpu.memory_space<vmem>>, vector<16x48xbf16>
    %c0_1 = arith.constant 0 : index
    %c0_2 = arith.constant 0 : index
    %c0_3 = arith.constant 0 : index
    %1 = vector.load %arg3[%c0_1, %c0_2, %c0_3] : memref<1x48x256xbf16, #tpu.memory_space<vmem>>, vector<1x48x256xbf16>
    %2 = vector.shape_cast %1 : vector<1x48x256xbf16> to vector<48x256xbf16>
    %cst = arith.constant dense<0.000000e+00> : vector<16x256xf32>
    %3 = tpu.matmul %0, %2, %cst {dimension_numbers = #tpu.dot_dimension_numbers<[1], [0], [0], [1], [0, 0, 1, 1], [], []>} : vector<16x48xbf16>, vector<48x256xbf16>, vector<16x256xf32> -> vector<16x256xf32>
    %c0_4 = arith.constant 0 : index
    %c0_5 = arith.constant 0 : index
    %4 = vector.load %arg5[%c0_4, %c0_5] : memref<16x1xf32, #tpu.memory_space<vmem>>, vector<16x1xf32>
    %5 = vector.broadcast %4 : vector<16x1xf32> to vector<16x256xf32>
    %6 = arith.addf %3, %5 : vector<16x256xf32>
    %cst_6 = arith.constant 0.000000e+00 : f32
    %7 = vector.broadcast %cst_6 : f32 to vector<16x256xf32>
    %8 = arith.maximumf %6, %7 : vector<16x256xf32>
    %c0_7 = arith.constant 0 : index
    %c0_8 = arith.constant 0 : index
    %c0_9 = arith.constant 0 : index
    %9 = vector.load %arg6[%c0_7, %c0_8, %c0_9] : memref<1x16x256xbf16, #tpu.memory_space<vmem>>, vector<1x16x256xbf16>
    %10 = vector.shape_cast %9 : vector<1x16x256xbf16> to vector<16x256xbf16>
    %11 = arith.extf %10 : vector<16x256xbf16> to vector<16x256xf32>
    %12 = arith.addf %8, %11 : vector<16x256xf32>
    %13 = arith.truncf %12 : vector<16x256xf32> to vector<16x256xbf16>
    %c0_10 = arith.constant 0 : index
    %c0_11 = arith.constant 0 : index
    %c0_12 = arith.constant 0 : index
    %14 = vector.load %arg7[%c0_10, %c0_11, %c0_12] : memref<1x16x256xbf16, #tpu.memory_space<vmem>>, vector<1x16x256xbf16>
    %15 = vector.shape_cast %14 : vector<1x16x256xbf16> to vector<16x256xbf16>
    %16 = vector.shape_cast %13 : vector<16x256xbf16> to vector<1x16x256xbf16>
    tpu.vector_store %arg7[%c0_10, %c0_11, %c0_12], %16 {strides = array<i32>} : memref<1x16x256xbf16, #tpu.memory_space<vmem>>, vector<1x16x256xbf16>,
    return
  }
  func.func @transform_0(%arg0: i32, %arg1: i32, %arg2: i32) -> (i32, i32, i32) {
    %c0_i32 = arith.constant 0 : i32
    %c0_i32_0 = arith.constant 0 : i32
    return %arg0, %c0_i32, %arg2 : i32, i32, i32
  }
  func.func @transform_1(%arg0: i32, %arg1: i32, %arg2: i32) -> (i32, i32) {
    %c0_i32 = arith.constant 0 : i32
    %c0_i32_0 = arith.constant 0 : i32
    return %arg1, %c0_i32 : i32, i32
  }
  func.func @transform_2(%arg0: i32, %arg1: i32, %arg2: i32) -> (i32, i32) {
    %c0_i32 = arith.constant 0 : i32
    %c0_i32_0 = arith.constant 0 : i32
    return %arg1, %c0_i32 : i32, i32
  }
  func.func @transform_3(%arg0: i32, %arg1: i32, %arg2: i32) -> (i32, i32, i32) {
    %c0_i32 = arith.constant 0 : i32
    return %arg0, %arg1, %arg2 : i32, i32, i32
  }
  func.func @transform_4(%arg0: i32, %arg1: i32, %arg2: i32) -> (i32, i32, i32) {
    %c0_i32 = arith.constant 0 : i32
    return %arg0, %arg1, %arg2 : i32, i32, i32
  }
}

</mosaic_0001>

<llo_original>
// kernel: conv_norm_act.2
$region0: #{conv_norm_act.2}
  #allocation0 [shape = 'u32[]', space=smem, size = 0x4, offset = 0x4, fixed_abs, tag = 'smem constant byte address 0x4 - core index']
  #allocation1 [shape = 'u32[144,128]{1,0:T(1,128)}', space=vmem, size = 0x12000, scoped, tag = 'internal scratch']
  #allocation2 [shape = 'u32[2048]{0}', space=vmem, size = 0x2000, scoped, tag = 'scoped memory for conv_norm_act.2']
  #allocation3 [shape = 'u32[2048]{0}', space=vmem, size = 0x2000, scoped, tag = 'scoped memory for conv_norm_act.2']
  #allocation4 [shape = 'u32[2048]{0}', space=vmem, size = 0x2000, scoped, tag = 'scoped memory for conv_norm_act.2']
  #allocation5 [shape = 'u32[2048]{0}', space=vmem, size = 0x2000, scoped, tag = 'scoped memory for conv_norm_act.2']
  #allocation6 [shape = 'u32[2048]{0}', space=vmem, size = 0x2000, scoped, tag = 'scoped memory for conv_norm_act.2']
  %s0 = inlined_call_operand.vmem [shape: bf16[16,48], index: 0, kind: input, shape index: {}]
  %s1 = inlined_call_operand.vmem [shape: f32[16,1], index: 1, kind: input, shape index: {}]
  %s2 = inlined_call_operand.vmem [shape: bf16[2,16,256], index: 2, kind: input, shape index: {}]
  %s3 = inlined_call_operand.vmem [shape: bf16[2,36,256], index: 3, kind: input, shape index: {}]
  %s4 = inlined_call_operand.<no memory space> [shape: bf16[], index: 4, kind: input, shape index: {}]
  %s5 = inlined_call_operand.vmem [shape: bf16[2,16,256], index: 5, kind: output, shape index: {}]
  %s6 = sld [smem:[#allocation0]]
  $region49: #{conv_norm_act.2} parent=0
    _
  %s8 = ssub.s32 1, %s6
  %s9 = scalar_select 0, %s8, %s6
  %v10 = vstv %s4
  %v11 = vunpack.i.l.bf16 %v10
  %v13 = vunpack.i.h.bf16 %v10
  loop: start=0, step=1, limit=4
  $region2: #{conv_norm_act.2} parent=0 // loop_pre_header
    _
  $region3: #{conv_norm_act.2} parent=0 // loop_header
    %s16 = sphi 0, %s20
    %p17 = scmp.ge.s32.totalorder %s16, 4
    %s23 = sphi 0, %s42
    %s24 = sphi 0, %s38
    %s25 = sphi 0, %s34
    %s26 = sphi 0, %s23
    %s27 = sphi 0, %s24
    %s28 = sphi 0, %s25
    %s29 = sphi 0, %s26
    %s30 = sphi 0, %s27
    %s31 = sphi 0, %s28
    %s47 = sphi 0, %s49
    %s50 = sphi 0, %s47
    %s51 = sphi 0, %s50
    %s67 = sphi 0, %s51
    %s73 = sphi 0, %s75
    %s76 = sphi 0, %s73
    %s77 = sphi 0, %s76
    %s93 = sphi 0, %s77
    %s99 = sphi 0, %s101
    %s102 = sphi 0, %s99
    %s103 = sphi 0, %s102
    %s119 = sphi 0, %s103
    %s129 = sphi 0, %s131
    %s132 = sphi 0, %s129
    %s133 = sphi 0, %s132
    %s149 = sphi 0, %s133
    %s159 = sphi 0, %s161
    %s162 = sphi 0, %s159
    %s163 = sphi 0, %s162
    %s179 = sphi 0, %s163
  $region4: #{conv_norm_act.2} parent=0 // loop_header_branch
    %19 = sbr.rel (%p17) target = $region8
  $region5: #{conv_norm_act.2} parent=0 // loop_body
    %s21 = ssub.s32 %s16, 1
    %s22 = ssub.s32 %s16, 2
    %s32 = sadd.s32 1, %s25
    %p33 = scmp.ge.s32.totalorder %s32, 1
    %s34 = scalar_select %p33, 0, %s32
    %s35 = sadd.s32 1, %s24
    %s36 = scalar_select %p33, %s35, %s24
    %p37 = scmp.ge.s32.totalorder %s36, 1
    %s38 = scalar_select %p37, 0, %s36
    %s39 = sadd.s32 1, %s23
    %s40 = scalar_select %p37, %s39, %s23
    %p41 = scmp.ge.s32.totalorder %s40, 2
    %s42 = scalar_select %p41, 0, %s40
    %s43 = ssub.s32 %s23, %s42
    %s44 = ssub.s32 %s25, %s34
    %s45 = sor.u32 %s43, %s44
    %p46 = scmp.eq.s32.totalorder %s45, 0
    %s48 = sadd.s32 %s47, 1
    %s49 = scalar_select %p46, %s47, %s48
    %p52 = pneg %p46
    %p53 = scmp.eq.s32.totalorder %s16, 1
    %p54 = por %p52, %p53
    %p55 = scmp.ne.s32.totalorder %s47, %s50
    %p56 = scmp.eq.s32.totalorder %s16, 0
    %p57 = por %p55, %p56
    %p58 = scmp.ne.s32.totalorder %s47, %s50
    %p59 = scmp.eq.s32.totalorder %s21, 1
    %p60 = por %p58, %p59
    %p61 = scmp.ne.s32.totalorder %s50, %s51
    %p62 = scmp.eq.s32.totalorder %s21, 0
    %p63 = por %p61, %p62
    %p64 = scmp.ne.s32.totalorder %s50, %s51
    %p65 = scmp.eq.s32.totalorder %s22, 1
    %p66 = por %p64, %p65
    %p68 = scmp.ne.s32.totalorder %s51, %s67
    %p69 = scmp.eq.s32.totalorder %s22, 0
    %p70 = por %p68, %p69
    %s71 = ssub.s32 %s24, %s38
    %p72 = scmp.eq.s32.totalorder %s71, 0
    %s74 = sadd.s32 %s73, 1
    %s75 = scalar_select %p72, %s73, %s74
    %p78 = pneg %p72
    %p79 = scmp.eq.s32.totalorder %s16, 1
    %p80 = por %p78, %p79
    %p81 = scmp.ne.s32.totalorder %s73, %s76
    %p82 = scmp.eq.s32.totalorder %s16, 0
    %p83 = por %p81, %p82
    %p84 = scmp.ne.s32.totalorder %s73, %s76
    %p85 = scmp.eq.s32.totalorder %s21, 1
    %p86 = por %p84, %p85
    %p87 = scmp.ne.s32.totalorder %s76, %s77
    %p88 = scmp.eq.s32.totalorder %s21, 0
    %p89 = por %p87, %p88
    %p90 = scmp.ne.s32.totalorder %s76, %s77
    %p91 = scmp.eq.s32.totalorder %s22, 1
    %p92 = por %p90, %p91
    %p94 = scmp.ne.s32.totalorder %s77, %s93
    %p95 = scmp.eq.s32.totalorder %s22, 0
    %p96 = por %p94, %p95
    %s97 = ssub.s32 %s24, %s38
    %p98 = scmp.eq.s32.totalorder %s97, 0
    %s100 = sadd.s32 %s99, 1
    %s101 = scalar_select %p98, %s99, %s100
    %p104 = pneg %p98
    %p105 = scmp.eq.s32.totalorder %s16, 1
    %p106 = por %p104, %p105
    %p107 = scmp.ne.s32.totalorder %s99, %s102
    %p108 = scmp.eq.s32.totalorder %s16, 0
    %p109 = por %p107, %p108
    %p110 = scmp.ne.s32.totalorder %s99, %s102
    %p111 = scmp.eq.s32.totalorder %s21, 1
    %p112 = por %p110, %p111
    %p113 = scmp.ne.s32.totalorder %s102, %s103
    %p114 = scmp.eq.s32.totalorder %s21, 0
    %p115 = por %p113, %p114
    %p116 = scmp.ne.s32.totalorder %s102, %s103
    %p117 = scmp.eq.s32.totalorder %s22, 1
    %p118 = por %p116, %p117
    %p120 = scmp.ne.s32.totalorder %s103, %s119
    %p121 = scmp.eq.s32.totalorder %s22, 0
    %p122 = por %p120, %p121
    %s123 = ssub.s32 %s23, %s42
    %s124 = ssub.s32 %s24, %s38
    %s125 = sor.u32 %s123, %s124
    %s126 = ssub.s32 %s25, %s34
    %s127 = sor.u32 %s125, %s126
    %p128 = scmp.eq.s32.totalorder %s127, 0
    %s130 = sadd.s32 %s129, 1
    %s131 = scalar_select %p128, %s129, %s130
    %p134 = pneg %p128
    %p135 = scmp.eq.s32.totalorder %s16, 1
    %p136 = por %p134, %p135
    %p137 = scmp.ne.s32.totalorder %s129, %s132
    %p138 = scmp.eq.s32.totalorder %s16, 0
    %p139 = por %p137, %p138
    %p140 = scmp.ne.s32.totalorder %s129, %s132
    %p141 = scmp.eq.s32.totalorder %s21, 1
    %p142 = por %p140, %p141
    %p143 = scmp.ne.s32.totalorder %s132, %s133
    %p144 = scmp.eq.s32.totalorder %s21, 0
    %p145 = por %p143, %p144
    %p146 = scmp.ne.s32.totalorder %s132, %s133
    %p147 = scmp.eq.s32.totalorder %s22, 1
    %p148 = por %p146, %p147
    %p150 = scmp.ne.s32.totalorder %s133, %s149
    %p151 = scmp.eq.s32.totalorder %s22, 0
    %p152 = por %p150, %p151
    %s153 = ssub.s32 %s23, %s42
    %s154 = ssub.s32 %s24, %s38
    %s155 = sor.u32 %s153, %s154
    %s156 = ssub.s32 %s25, %s34
    %s157 = sor.u32 %s155, %s156
    %p158 = scmp.eq.s32.totalorder %s157, 0
    %s160 = sadd.s32 %s159, 1
    %s161 = scalar_select %p158, %s159, %s160
    %p164 = pneg %p158
    %p165 = scmp.eq.s32.totalorder %s16, 1
    %p166 = por %p164, %p165
    %p167 = scmp.ne.s32.totalorder %s159, %s162
    %p168 = scmp.eq.s32.totalorder %s16, 0
    %p169 = por %p167, %p168
    %p170 = scmp.ne.s32.totalorder %s159, %s162
    %p171 = scmp.eq.s32.totalorder %s21, 1
    %p172 = por %p170, %p171
    %p173 = scmp.ne.s32.totalorder %s162, %s163
    %p174 = scmp.eq.s32.totalorder %s21, 0
    %p175 = por %p173, %p174
    %p176 = scmp.ne.s32.totalorder %s162, %s163
    %p177 = scmp.eq.s32.totalorder %s22, 1
    %p178 = por %p176, %p177
    %p180 = scmp.ne.s32.totalorder %s163, %s179
    %p181 = scmp.eq.s32.totalorder %s22, 0
    %p182 = por %p180, %p181
    %p183 = scmp.le.s32.totalorder 1, %s16
    %p184 = scmp.lt.s32.totalorder %s16, 3
    %p185 = pnand %p183, %p184
    %p186 = pneg %p185
    // Predicated region
    $region9: #{conv_norm_act.2} parent=5 // pred_check
      _
    $region10: #{conv_norm_act.2} parent=5 // pred_check_branch
      %188 = sbr.rel (%p185) target = $region12
    $region11: #{conv_norm_act.2} parent=5 // pred_region
      %s189 = ssub.s32 %s16, 1
      // Predicated region
      $region13: #{conv_norm_act.2} parent=11 // pred_check
        %p190 = pneg %p89
      $region14: #{conv_norm_act.2} parent=11 // pred_check_branch
        %192 = sbr.rel (%p190) target = $region16
      $region15: #{conv_norm_act.2} parent=11 // pred_region
        %s193 = smul.u32 2, %s27
        %p194 = scmp.lt.s32.totalorder %s193, 1
        %s195 = scalar_select %p194, %s193, 1
        %s196 = smul.addr %s195, 4
        %s197 = scalar_lea.vmem %s0, %s196
        %s198 = smul.u32 2, %s27
      $region16: #{conv_norm_act.2} parent=11 // pred_fallthru
        _
      // Predicated region
      $region17: #{conv_norm_act.2} parent=11 // pred_check
        %p199 = pneg %p115
      $region18: #{conv_norm_act.2} parent=11 // pred_check_branch
        %201 = sbr.rel (%p199) target = $region20
      $region19: #{conv_norm_act.2} parent=11 // pred_region
        %s202 = smul.u32 2, %s27
        %p203 = scmp.lt.s32.totalorder %s202, 1
        %s204 = scalar_select %p203, %s202, 1
        %s205 = smul.addr %s204, 8
        %s206 = scalar_lea.vmem %s1, %s205
        %s207 = smul.u32 2, %s27
      $region20: #{conv_norm_act.2} parent=11 // pred_fallthru
        _
    $region12: #{conv_norm_act.2} parent=5 // pred_fallthru
      _
    %p208 = scmp.lt.s32.totalorder %s16, 2
    // Predicated region
    $region21: #{conv_norm_act.2} parent=5 // pred_check
      %p209 = pneg %p208
    $region22: #{conv_norm_act.2} parent=5 // pred_check_branch
      %211 = sbr.rel (%p209) target = $region24
    $region23: #{conv_norm_act.2} parent=5 // pred_region
      // Predicated region
      $region25: #{conv_norm_act.2} parent=23 // pred_check
        %p212 = pneg %p57
      $region26: #{conv_norm_act.2} parent=23 // pred_check_branch
        %214 = sbr.rel (%p212) target = $region28
      $region27: #{conv_norm_act.2} parent=23 // pred_region
        %s215 = smul.u32 2, %s25
        %p216 = scmp.lt.s32.totalorder %s23, 1
        %s217 = scalar_select %p216, %s23, 1
        %p218 = scmp.lt.s32.totalorder %s215, 1
        %s219 = scalar_select %p218, %s215, 1
        %s220 = smul.addr %s217, 10
        %s221 = sadd.s32 %s219, %s220
        %s222 = smul.addr %s221, 4
        %s223 = scalar_lea.vmem %s3, %s222
        %s224 = smul.u32 2, %s25
      $region28: #{conv_norm_act.2} parent=23 // pred_fallthru
        _
      // Predicated region
      $region29: #{conv_norm_act.2} parent=23 // pred_check
        %p225 = pneg %p139
      $region30: #{conv_norm_act.2} parent=23 // pred_check_branch
        %227 = sbr.rel (%p225) target = $region32
      $region31: #{conv_norm_act.2} parent=23 // pred_region
        %s228 = smul.u32 2, %s24
        %s229 = smul.u32 2, %s25
        %p230 = scmp.lt.s32.totalorder %s23, 1
        %s231 = scalar_select %p230, %s23, 1
        %p232 = scmp.lt.s32.totalorder %s228, 1
        %s233 = scalar_select %p232, %s228, 1
        %p234 = scmp.lt.s32.totalorder %s229, 1
        %s235 = scalar_select %p234, %s229, 1
        %s236 = smul.addr %s233, 2
        %s237 = sadd.s32 %s235, %s236
        %s238 = smul.addr %s231, 4
        %s239 = sadd.s32 %s237, %s238
        %s240 = smul.addr %s239, 4
        %s241 = scalar_lea.vmem %s2, %s240
        %s242 = smul.u32 2, %s24
        %s243 = smul.u32 2, %s25
      $region32: #{conv_norm_act.2} parent=23 // pred_fallthru
        _
    $region24: #{conv_norm_act.2} parent=5 // pred_fallthru
      _
    %p244 = scmp.le.s32.totalorder 1, %s16
    %p245 = scmp.lt.s32.totalorder %s16, 3
    %p246 = pnand %p244, %p245
    %p247 = pneg %p246
    // Predicated region
    $region33: #{conv_norm_act.2} parent=5 // pred_check
      _
    $region34: #{conv_norm_act.2} parent=5 // pred_check_branch
      %249 = sbr.rel (%p246) target = $region36
    $region35: #{conv_norm_act.2} parent=5 // pred_region
      #allocation7 [shape = 'u8[24576]{0}', space=vmem, size = 0x6000, dematerialized = true, scoped, tag = 'FusionAdapter Buffer %fusion.1 = bf16[2,48,256]{2,1,0:T(8,128)(2,1)} fusion(%param_3.1, %param_4), kind=kLoop, calls=%fused_computation.2.clone, metadata={op_name="jit(conv_norm_act)/jit(_pad)/pad" stack_frame_id=10}']
      %s250 = ssub.s32 %s16, 1
      %s251 = smul.u32 2, %s28
      %p252 = scmp.lt.s32.totalorder %s26, 1
      %s253 = scalar_select %p252, %s26, 1
      %p254 = scmp.lt.s32.totalorder %s251, 1
      %s255 = scalar_select %p254, %s251, 1
      %s256 = smul.addr %s253, 10
      %s257 = sadd.s32 %s255, %s256
      %s258 = smul.addr %s257, 4
      %s259 = scalar_lea.vmem %s3, %s258
      %p260 = pneg %p63
      %p261 = pneg %p60
      %s262 = smul.u32 2, %s27
      %p263 = scmp.lt.s32.totalorder %s262, 1
      %s264 = scalar_select %p263, %s262, 1
      %s265 = smul.addr %s264, 4
      %s266 = scalar_lea.vmem %s0, %s265
      %p267 = pneg %p89
      %p268 = pneg %p86
      %s269 = smul.u32 2, %s27
      %p270 = scmp.lt.s32.totalorder %s269, 1
      %s271 = scalar_select %p270, %s269, 1
      %s272 = smul.addr %s271, 8
      %s273 = scalar_lea.vmem %s1, %s272
      %p274 = pneg %p115
      %p275 = pneg %p112
      %s276 = smul.u32 2, %s27
      %s277 = smul.u32 2, %s28
      %p278 = scmp.lt.s32.totalorder %s26, 1
      %s279 = scalar_select %p278, %s26, 1
      %p280 = scmp.lt.s32.totalorder %s276, 1
      %s281 = scalar_select %p280, %s276, 1
      %p282 = scmp.lt.s32.totalorder %s277, 1
      %s283 = scalar_select %p282, %s277, 1
      %s284 = smul.addr %s281, 2
      %s285 = sadd.s32 %s283, %s284
      %s286 = smul.addr %s279, 4
      %s287 = sadd.s32 %s285, %s286
      %s288 = smul.addr %s287, 4
      %s289 = scalar_lea.vmem %s2, %s288
      %p290 = pneg %p145
      %p291 = pneg %p142
      %p292 = pneg %p175
      %p293 = pneg %p172
      %s294 = smul.u32 2, %s27
      %s295 = smul.u32 2, %s28
      %p296 = scmp.lt.s32.totalorder %s26, 1
      %s297 = scalar_select %p296, %s26, 1
      %p298 = scmp.lt.s32.totalorder %s294, 1
      %s299 = scalar_select %p298, %s294, 1
      %p300 = scmp.lt.s32.totalorder %s295, 1
      %s301 = scalar_select %p300, %s295, 1
      %s302 = smul.addr %s299, 2
      %s303 = sadd.s32 %s301, %s302
      %s304 = smul.addr %s297, 4
      %s305 = sadd.s32 %s303, %s304
      %s306 = smul.addr %s305, 4
      %s307 = scalar_lea.vmem %s5, %s306
      %s308 = smul.u32 2, %s28
      %p309 = scmp.lt.s32.totalorder %s26, 1
      %s310 = scalar_select %p309, %s26, 1
      %p311 = scmp.lt.s32.totalorder %s308, 1
      %s312 = scalar_select %p311, %s308, 1
      %s313 = smul.addr %s310, 10
      %s314 = sadd.s32 %s312, %s313
      %s315 = smul.addr %s314, 4
      %s316 = scalar_lea.vmem %s3, %s315
      %s317 = smul.u32 2, %s28
      %s318 = smul.u32 2, %s27
      %p319 = scmp.lt.s32.totalorder %s318, 1
      %s320 = scalar_select %p319, %s318, 1
      %s321 = smul.addr %s320, 4
      %s322 = scalar_lea.vmem %s0, %s321
      %s323 = smul.u32 2, %s27
      %s324 = smul.u32 2, %s27
      %p325 = scmp.lt.s32.totalorder %s324, 1
      %s326 = scalar_select %p325, %s324, 1
      %s327 = smul.addr %s326, 8
      %s328 = scalar_lea.vmem %s1, %s327
      %s329 = smul.u32 2, %s27
      %s330 = smul.u32 2, %s27
      %s331 = smul.u32 2, %s28
      %p332 = scmp.lt.s32.totalorder %s26, 1
      %s333 = scalar_select %p332, %s26, 1
      %p334 = scmp.lt.s32.totalorder %s330, 1
      %s335 = scalar_select %p334, %s330, 1
      %p336 = scmp.lt.s32.totalorder %s331, 1
      %s337 = scalar_select %p336, %s331, 1
      %s338 = smul.addr %s335, 2
      %s339 = sadd.s32 %s337, %s338
      %s340 = smul.addr %s333, 4
      %s341 = sadd.s32 %s339, %s340
      %s342 = smul.addr %s341, 4
      %s343 = scalar_lea.vmem %s2, %s342
      %s344 = smul.u32 2, %s27
      %s345 = smul.u32 2, %s28
      %s346 = smul.u32 2, %s27
      %s347 = smul.u32 2, %s28
      %p348 = scmp.lt.s32.totalorder %s26, 1
      %s349 = scalar_select %p348, %s26, 1
      %p350 = scmp.lt.s32.totalorder %s346, 1
      %s351 = scalar_select %p350, %s346, 1
      %p352 = scmp.lt.s32.totalorder %s347, 1
      %s353 = scalar_select %p352, %s347, 1
      %s354 = smul.addr %s351, 2
      %s355 = sadd.s32 %s353, %s354
      %s356 = smul.addr %s349, 4
      %s357 = sadd.s32 %s355, %s356
      %s358 = smul.addr %s357, 4
      %s359 = scalar_lea.vmem %s5, %s358
      %s360 = smul.u32 2, %s27
      %s361 = smul.u32 2, %s28
      %v362 = vld [vmem:[%s316] sm:$0xf]
      %v363 = vunpack.c.l.bf16 %v362
      %v364 = vunpack.c.h.bf16 %v362
      %v365 = vlaneseq
      %v366 = vshrl.u32 %v365, 7
      %vm368 = vcmp.lt.s32.totalorder %v366, 36
      %v369 = vsel %vm368, %v363, %v11
      %v370 = vpack.c.bf16 0.0, %v369
      %372 = vst [vmem:[#allocation7] sm:$0xf] %v370
      %s373 = scalar_lea.vmem %s316, 4
      %v374 = vld [vmem:[%s373] sm:$0xf]
      %v375 = vunpack.c.l.bf16 %v374
      %v376 = vunpack.c.h.bf16 %v374
      %v377 = vlaneseq
      %v378 = vshrl.u32 %v377, 7
      %vm380 = vcmp.lt.s32.totalorder %v378, 36
      %v381 = vsel %vm380, %v375, %v11
      %s382 = scalar_lea.vmem [#allocation7], 4
      %v383 = vpack.c.bf16 0.0, %v381
      %385 = vst [vmem:[%s382] sm:$0xf] %v383
      %s386 = scalar_lea.vmem %s316, 8
      %v387 = vld [vmem:[%s386] sm:$0xf]
      %v388 = vunpack.c.l.bf16 %v387
      %v389 = vunpack.c.h.bf16 %v387
      %v390 = vlaneseq
      %v391 = vshrl.u32 %v390, 7
      %v392 = vadd.s32 %v391, 8
      %vm393 = vcmp.lt.s32.totalorder %v392, 36
      %v394 = vsel %vm393, %v388, %v11
      %s395 = scalar_lea.vmem [#allocation7], 8
      %v396 = vpack.c.bf16 0.0, %v394
      %398 = vst [vmem:[%s395] sm:$0xf] %v396
      %s399 = scalar_lea.vmem %s316, 12
      %v400 = vld [vmem:[%s399] sm:$0xf]
      %v401 = vunpack.c.l.bf16 %v400
      %v402 = vunpack.c.h.bf16 %v400
      %v403 = vlaneseq
      %v404 = vshrl.u32 %v403, 7
      %v405 = vadd.s32 %v404, 8
      %vm406 = vcmp.lt.s32.totalorder %v405, 36
      %v407 = vsel %vm406, %v401, %v11
      %s408 = scalar_lea.vmem [#allocation7], 12
      %v409 = vpack.c.bf16 0.0, %v407
      %411 = vst [vmem:[%s408] sm:$0xf] %v409
      %s412 = scalar_lea.vmem %s316, 16
      %v413 = vld [vmem:[%s412] sm:$0xf]
      %v414 = vunpack.c.l.bf16 %v413
      %v415 = vunpack.c.h.bf16 %v413
      %v416 = vlaneseq
      %v417 = vshrl.u32 %v416, 7
      %v418 = vadd.s32 %v417, 16
      %vm419 = vcmp.lt.s32.totalorder %v418, 36
      %v420 = vsel %vm419, %v414, %v11
      %s421 = scalar_lea.vmem [#allocation7], 16
      %v422 = vpack.c.bf16 0.0, %v420
      %424 = vst [vmem:[%s421] sm:$0xf] %v422
      %s425 = scalar_lea.vmem %s316, 20
      %v426 = vld [vmem:[%s425] sm:$0xf]
      %v427 = vunpack.c.l.bf16 %v426
      %v428 = vunpack.c.h.bf16 %v426
      %v429 = vlaneseq
      %v430 = vshrl.u32 %v429, 7
      %v431 = vadd.s32 %v430, 16
      %vm432 = vcmp.lt.s32.totalorder %v431, 36
      %v433 = vsel %vm432, %v427, %v11
      %s434 = scalar_lea.vmem [#allocation7], 20
      %v435 = vpack.c.bf16 0.0, %v433
      %437 = vst [vmem:[%s434] sm:$0xf] %v435
      %s438 = scalar_lea.vmem %s316, 24
      %s440 = sor.u32 255, 127
      %s441 = sand.u32 %s440, 85
      %s442 = sshrl.u32 %s441, 1
      %s443 = sor.u32 %s441, %s442
      %s444 = sand.u32 51, %s443
      %s445 = sshrl.u32 %s444, 2
      %s446 = sor.u32 %s444, %s445
      %s447 = sand.u32 15, %s446
      %v448 = vld [vmem:[%s438] sm:%s447]
      %v449 = vunpack.c.l.bf16 %v448
      %v450 = vunpack.c.h.bf16 %v448
      %v451 = vlaneseq
      %v452 = vshrl.u32 %v451, 7
      %v453 = vadd.s32 %v452, 24
      %vm454 = vcmp.lt.s32.totalorder %v453, 36
      %v455 = vsel %vm454, %v449, %v11
      %s456 = scalar_lea.vmem [#allocation7], 24
      %v457 = vpack.c.bf16 0.0, %v455
      %459 = vst [vmem:[%s456] sm:$0xf] %v457
      %s460 = scalar_lea.vmem %s316, 28
      %s462 = sor.u32 255, 127
      %s463 = sand.u32 %s462, 85
      %s464 = sshrl.u32 %s463, 1
      %s465 = sor.u32 %s463, %s464
      %s466 = sand.u32 51, %s465
      %s467 = sshrl.u32 %s466, 2
      %s468 = sor.u32 %s466, %s467
      %s469 = sand.u32 15, %s468
      %v470 = vld [vmem:[%s460] sm:%s469]
      %v471 = vunpack.c.l.bf16 %v470
      %v472 = vunpack.c.h.bf16 %v470
      %v473 = vlaneseq
      %v474 = vshrl.u32 %v473, 7
      %v475 = vadd.s32 %v474, 24
      %vm476 = vcmp.lt.s32.totalorder %v475, 36
      %v477 = vsel %vm476, %v471, %v11
      %s478 = scalar_lea.vmem [#allocation7], 28
      %v479 = vpack.c.bf16 0.0, %v477
      %481 = vst [vmem:[%s478] sm:$0xf] %v479
      %s482 = scalar_lea.vmem %s316, 32
      %s484 = sor.u32 255, 127
      %s485 = sand.u32 %s484, 85
      %s486 = sshrl.u32 %s485, 1
      %s487 = sor.u32 %s485, %s486
      %s488 = sand.u32 51, %s487
      %s489 = sshrl.u32 %s488, 2
      %s490 = sor.u32 %s488, %s489
      %s491 = sand.u32 15, %s490
      %v492 = vld [vmem:[%s482] sm:%s491]
      %v493 = vunpack.c.l.bf16 %v492
      %v494 = vunpack.c.h.bf16 %v492
      %v495 = vlaneseq
      %v496 = vshrl.u32 %v495, 7
      %v497 = vadd.s32 %v496, 32
      %vm498 = vcmp.lt.s32.totalorder %v497, 36
      %v499 = vsel %vm498, %v493, %v11
      %s500 = scalar_lea.vmem [#allocation7], 32
      %v501 = vpack.c.bf16 0.0, %v499
      %503 = vst [vmem:[%s500] sm:$0xf] %v501
      %s504 = scalar_lea.vmem %s316, 36
      %s506 = sor.u32 255, 127
      %s507 = sand.u32 %s506, 85
      %s508 = sshrl.u32 %s507, 1
      %s509 = sor.u32 %s507, %s508
      %s510 = sand.u32 51, %s509
      %s511 = sshrl.u32 %s510, 2
      %s512 = sor.u32 %s510, %s511
      %s513 = sand.u32 15, %s512
      %v514 = vld [vmem:[%s504] sm:%s513]
      %v515 = vunpack.c.l.bf16 %v514
      %v516 = vunpack.c.h.bf16 %v514
      %v517 = vlaneseq
      %v518 = vshrl.u32 %v517, 7
      %v519 = vadd.s32 %v518, 32
      %vm520 = vcmp.lt.s32.totalorder %v519, 36
      %v521 = vsel %vm520, %v515, %v11
      %s522 = scalar_lea.vmem [#allocation7], 36
      %v523 = vpack.c.bf16 0.0, %v521
      %525 = vst [vmem:[%s522] sm:$0xf] %v523
      %s526 = scalar_lea.vmem [#allocation7], 40
      %v527 = vpack.c.bf16 0.0, %v11
      %529 = vst [vmem:[%s526] sm:$0xf] %v527
      %s530 = scalar_lea.vmem [#allocation7], 44
      %v531 = vpack.c.bf16 0.0, %v11
      %533 = vst [vmem:[%s530] sm:$0xf] %v531
      %v535 = vld [vmem:[%s322] sm:$0xf]
      %v536 = vld [vmem:[%s322 + $0x4] sm:$0xf]
      %v537 = vld [vmem:[#allocation7] sm:$0xff]
      %v538 = vld [vmem:[#allocation7 + $0x8] sm:$0xff]
      %v539 = vld [vmem:[#allocation7 + $0x10] sm:$0xff]
      %v540 = vld [vmem:[#allocation7 + $0x18] sm:$0xff]
      %v541 = vld [vmem:[#allocation7 + $0x20] sm:$0xff]
      %v542 = vld [vmem:[#allocation7 + $0x28] sm:$0xff]
      %v543 = vld [vmem:[%s328] sm:$0xff]
      %v544 = vld [vmem:[%s328 + $0x8] sm:$0xff]
      %546 = vset.pattern.permute.xlu0 0
      %547 = vperm.xlu0 %546, %v543
      %v548 = vpop.permute.xlu0 %547
      %551 = vset.pattern.permute.xlu0 0
      %552 = vperm.xlu0 %551, %v544
      %v553 = vpop.permute.xlu0 %552
      %v557 = vunpack.c.l.b16 %v535
      %v558 = vunpack.c.l.b16 %v536
      %v559 = vpack.c.b16 %v558, %v557
      %v566 = vunpack.c.l.b16 %v537
      %v567 = vunpack.c.h.b16 %v537
      %v568 = vunpack.c.l.b16 %v538
      %v569 = vunpack.c.h.b16 %v538
      %v570 = vunpack.c.l.b16 %v539
      %v571 = vunpack.c.h.b16 %v539
      %v572 = vunpack.c.l.b16 %v540
      %v573 = vunpack.c.h.b16 %v540
      %v574 = vunpack.c.l.b16 %v541
      %v575 = vunpack.c.h.b16 %v541
      %v576 = vunpack.c.l.b16 %v542
      %v577 = vunpack.c.h.b16 %v542
      %v578 = vpack.c.b16 %v568, %v566
      %v579 = vpack.c.b16 %v569, %v567
      %v580 = vpack.c.b16 %v572, %v570
      %v581 = vpack.c.b16 %v573, %v571
      %v582 = vpack.c.b16 %v576, %v574
      %v583 = vpack.c.b16 %v577, %v575
      %vm590 = vcmask 392192
      %v592 = vsel %vm590, %v559, 0
      %594 = vmatprep.subr.bf16.mxu0 %v579
      %595 = vmatpush1.bf16.msra.mxu0 %v578
      %596 = vmatprep.subr.bf16.mxu0 %v581
      %597 = vmatpush1.bf16.msra.mxu0 %v580
      %598 = vmatprep.subr.bf16.mxu0 %v583
      %599 = vmatpush1.bf16.msra.mxu0 %v582
      %600 = vmatprep.subr.bf16.mxu0 0
      %601 = vmatpush1.bf16.msra.mxu0 0
      %602 = vmatprep.subr.bf16.mxu0 0
      %603 = vmatpush1.bf16.msra.mxu0 0
      %604 = vmatprep.subr.bf16.mxu0 0
      %605 = vmatpush1.bf16.msra.mxu0 0
      %606 = vmatprep.subr.bf16.mxu0 0
      %607 = vmatpush1.bf16.msra.mxu0 0
      %608 = vmatprep.subr.bf16.mxu0 0
      %609 = vmatpush1.bf16.msra.mxu0 0
      %610 = vmatprep.subr.bf16.mxu0 0
      %611 = vmatpush1.bf16.msra.mxu0 0
      %612 = vmatprep.subr.bf16.mxu0 0
      %613 = vmatpush1.bf16.msra.mxu0 0
      %614 = vmatprep.subr.bf16.mxu0 0
      %615 = vmatpush1.bf16.msra.mxu0 0
      %616 = vmatprep.subr.bf16.mxu0 0
      %617 = vmatpush1.bf16.msra.mxu0 0
      %618 = vmatprep.subr.bf16.mxu0 0
      %619 = vmatpush1.bf16.msra.mxu0 0
      %620 = vmatprep.subr.bf16.mxu0 0
      %621 = vmatpush1.bf16.msra.mxu0 0
      %622 = vmatprep.subr.bf16.mxu0 0
      %623 = vmatpush1.bf16.msra.mxu0 0
      %624 = vmatprep.subr.bf16.mxu0 0
      %625 = vmatpush1.bf16.msra.mxu0 0
      %626 = vmatprep.mubr.bf16.mxu0 0
      %627 = vmatmul.mubr.bf16.gmra.mrb[0].mxu0 %v592
      %v628 = vpop.f32.mrb[0].mxu0
      %v629 = vadd.f32 %v548, %v628
      %v630 = vpop.f32.mrb[0].mxu0
      %v631 = vadd.f32 %v548, %v630
      %v632 = vpop.f32.mrb[0].mxu0
      %v633 = vadd.f32 %v553, %v632
      %v634 = vpop.f32.mrb[0].mxu0
      %v635 = vadd.f32 %v553, %v634
      %636 = vdwg.mxu0
      %v637 = vmax.f32 %v629, 0.0
      %v638 = vmax.f32 %v631, 0.0
      %v639 = vmax.f32 %v633, 0.0
      %v640 = vmax.f32 %v635, 0.0
      %v641 = vld [vmem:[%s343] sm:$0xff]
      %v642 = vld [vmem:[%s343 + $0x8] sm:$0xff]
      %v643 = vunpack.c.l.bf16 %v641
      %v644 = vunpack.c.h.bf16 %v641
      %v645 = vunpack.c.l.bf16 %v642
      %v646 = vunpack.c.h.bf16 %v642
      %v647 = vadd.f32 %v637, %v643
      %v648 = vadd.f32 %v638, %v644
      %v649 = vadd.f32 %v639, %v645
      %v650 = vadd.f32 %v640, %v646
      %v651 = vpack.c.bf16 %v649, %v647
      %v652 = vpack.c.bf16 %v650, %v648
      %v655 = vunpack.c.l.b16 %v651
      %v656 = vunpack.c.l.b16 %v652
      %v657 = vunpack.c.h.b16 %v651
      %v658 = vunpack.c.h.b16 %v652
      %v659 = vpack.c.b16 %v656, %v655
      %v660 = vpack.c.b16 %v658, %v657
      %663 = vst [vmem:[%s359] sm:$0xff] %v659
      %664 = vst [vmem:[%s359 + $0x8] sm:$0xff] %v660
      %s665 = smul.u32 2, %s27
      %s666 = smul.u32 2, %s28
      %p667 = scmp.lt.s32.totalorder %s26, 1
      %s668 = scalar_select %p667, %s26, 1
      %p669 = scmp.lt.s32.totalorder %s665, 1
      %s670 = scalar_select %p669, %s665, 1
      %p671 = scmp.lt.s32.totalorder %s666, 1
      %s672 = scalar_select %p671, %s666, 1
      %s673 = smul.addr %s670, 2
      %s674 = sadd.s32 %s672, %s673
      %s675 = smul.addr %s668, 4
      %s676 = sadd.s32 %s674, %s675
      %s677 = smul.addr %s676, 4
      %s678 = scalar_lea.vmem %s5, %s677
      // Predicated region
      $region37: #{conv_norm_act.2} parent=35 // pred_check
        %p679 = pneg %p172
      $region38: #{conv_norm_act.2} parent=35 // pred_check_branch
        %681 = sbr.rel (%p679) target = $region40
      $region39: #{conv_norm_act.2} parent=35 // pred_region
        %s682 = smul.u32 2, %s27
        %s683 = smul.u32 2, %s28
      $region40: #{conv_norm_act.2} parent=35 // pred_fallthru
        _
    $region36: #{conv_norm_act.2} parent=5 // pred_fallthru
      _
    %p684 = scmp.le.s32.totalorder 2, %s16
    // Predicated region
    $region41: #{conv_norm_act.2} parent=5 // pred_check
      %p685 = pneg %p684
    $region42: #{conv_norm_act.2} parent=5 // pred_check_branch
      %687 = sbr.rel (%p685) target = $region44
    $region43: #{conv_norm_act.2} parent=5 // pred_region
      %s688 = ssub.s32 %s16, 2
      // Predicated region
      $region45: #{conv_norm_act.2} parent=43 // pred_check
        %p689 = pneg %p178
      $region46: #{conv_norm_act.2} parent=43 // pred_check_branch
        %691 = sbr.rel (%p689) target = $region48
      $region47: #{conv_norm_act.2} parent=43 // pred_region
        %s692 = smul.u32 2, %s30
        %s693 = smul.u32 2, %s31
        %p694 = scmp.lt.s32.totalorder %s29, 1
        %s695 = scalar_select %p694, %s29, 1
        %p696 = scmp.lt.s32.totalorder %s692, 1
        %s697 = scalar_select %p696, %s692, 1
        %p698 = scmp.lt.s32.totalorder %s693, 1
        %s699 = scalar_select %p698, %s693, 1
        %s700 = smul.addr %s697, 2
        %s701 = sadd.s32 %s699, %s700
        %s702 = smul.addr %s695, 4
        %s703 = sadd.s32 %s701, %s702
        %s704 = smul.addr %s703, 4
        %s705 = scalar_lea.vmem %s5, %s704
      $region48: #{conv_norm_act.2} parent=43 // pred_fallthru
        _
    $region44: #{conv_norm_act.2} parent=5 // pred_fallthru
      _
  $region6: #{conv_norm_act.2} parent=0 // loop_footer
    %s20 = sadd.s32 1, %s16
  $region7: #{conv_norm_act.2} parent=0 // loop_footer_branch
    %15 = sbr.rel target = $region3
  $region8: #{conv_norm_act.2} parent=0 // loop_exit
    _

</llo_original>
